<compile_context>
chip_gen: v5e
topology: v5e:2x2
jax: 0.10.0
libtpu: 0.0.40
codegen_flags: <defaults>
</compile_context>

<pallas_src>
import jax
import jax.numpy as jnp
from jax.experimental import pallas as pl
from jax.experimental.pallas import tpu as pltpu


def _copy_kernel(x_ref, o_ref):
    # forward: return encoded_x (encoded_xi is intentionally never DMA'd)
    o_ref[...] = x_ref[...]


def _pick_lane_width(total_elems):
    """Largest lane-dense width (multiple of 128) that divides the flat size."""
    for lanes in (2048, 1024, 512, 256, 128):
        if total_elems % lanes == 0:
            return lanes
    return None


def simple_enc(encoded_x, encoded_xi=None):
    """Pallas implementation of SimpleEnc.forward (encoded_xi is ignored)."""
    del encoded_xi  # SimpleEnc does not use the covariate.

    orig_shape = encoded_x.shape
    dtype = encoded_x.dtype
    itemsize = jnp.dtype(dtype).itemsize
    total = int(encoded_x.size)
    nbytes = total * itemsize

    compiler_params = pltpu.CompilerParams(
        dimension_semantics=("parallel",),
        vmem_limit_bytes=32 * 1024 * 1024,
    )
    cost = pl.CostEstimate(flops=0, transcendentals=0, bytes_accessed=2 * nbytes)

    lanes = _pick_lane_width(total)
    if lanes is not None:
        # Lane-dense 2D view: (rows, lanes) with lanes % 128 == 0.
        rows = total // lanes
        x2d = encoded_x.reshape(rows, lanes)

        # ~2 MiB tiles: big enough to hide per-step overhead, small enough that
        # 2 (in bufs) + 2 (out bufs) tiles stay well under the scoped VMEM limit
        # on every chip generation (v5e 16 MiB default, v7x 64 MiB physical).
        target_block_bytes = 2 * 1024 * 1024
        block_rows = min(rows, max(8, target_block_bytes // (lanes * itemsize)))
        if block_rows < rows:
            block_rows = max(8, (block_rows // 8) * 8)  # keep (8,128) alignment

        grid = (pl.cdiv(rows, block_rows),)
        out2d = pl.pallas_call(
            _copy_kernel,
            out_shape=jax.ShapeDtypeStruct((rows, lanes), dtype),
            grid=grid,
            in_specs=[pl.BlockSpec((block_rows, lanes), lambda i: (i, 0))],
            out_specs=pl.BlockSpec((block_rows, lanes), lambda i: (i, 0)),
            compiler_params=compiler_params,
            cost_estimate=cost,
        )(x2d)
        return out2d.reshape(orig_shape)

    # Fallback (flat size not a multiple of 128): single full-block copy of x
    # only — still no DMA of the unused covariate.
    n_dims = encoded_x.ndim
    return pl.pallas_call(
        _copy_kernel,
        out_shape=jax.ShapeDtypeStruct(orig_shape, dtype),
        grid=(1,),
        in_specs=[pl.BlockSpec(orig_shape, lambda i: (0,) * n_dims)],
        out_specs=pl.BlockSpec(orig_shape, lambda i: (0,) * n_dims),
        compiler_params=compiler_params,
        cost_estimate=cost,
    )(encoded_x)


if __name__ == "__main__":
    key = jax.random.PRNGKey(0)
    kx, kxi = jax.random.split(key)
    # Small NCHW shapes: batch=2, channels=4, spatial=16x16
    encoded_x = jax.random.normal(kx, (2, 4, 16, 16), dtype=jnp.float32)
    encoded_xi = jax.random.normal(kxi, (2, 4, 16, 16), dtype=jnp.float32)

    out = simple_enc(encoded_x, encoded_xi)
    out = jax.block_until_ready(out)

    # Semantics check: output must equal encoded_x exactly.
    assert out.shape == encoded_x.shape and out.dtype == encoded_x.dtype
    assert bool(jnp.all(out == encoded_x))
    print("KERNEL_OK")
</pallas_src>

<mosaic_0001>
module attributes {stable_mosaic.version = 11 : i64} {
  func.func @_copy_kernel(%arg0: i32, %arg1: memref<1x2048xf32, #tpu.memory_space<vmem>>, %arg2: memref<1x2048xf32, #tpu.memory_space<vmem>>) attributes {dimension_semantics = [#tpu.dimension_semantics<parallel>], iteration_bounds = array<i64: 1>, scalar_prefetch = 0 : i64, scratch_operands = 0 : i64, tpu.core_type = #tpu.core_type<tc>, window_params = [{transform_indices = @transform_0, window_bounds = array<i64: 1, 2048>}, {transform_indices = @transform_1, window_bounds = array<i64: 1, 2048>}]} {
    %c0 = arith.constant 0 : index
    %c0_0 = arith.constant 0 : index
    %0 = vector.load %arg1[%c0, %c0_0] : memref<1x2048xf32, #tpu.memory_space<vmem>>, vector<1x2048xf32>
    %c0_1 = arith.constant 0 : index
    %c0_2 = arith.constant 0 : index
    %1 = vector.load %arg2[%c0_1, %c0_2] : memref<1x2048xf32, #tpu.memory_space<vmem>>, vector<1x2048xf32>
    tpu.vector_store %arg2[%c0_1, %c0_2], %0 {strides = array<i32>} : memref<1x2048xf32, #tpu.memory_space<vmem>>, vector<1x2048xf32>,
    return
  }
  func.func @transform_0(%arg0: i32) -> (i32, i32) {
    %c0_i32 = arith.constant 0 : i32
    %c0_i32_0 = arith.constant 0 : i32
    return %arg0, %c0_i32 : i32, i32
  }
  func.func @transform_1(%arg0: i32) -> (i32, i32) {
    %c0_i32 = arith.constant 0 : i32
    %c0_i32_0 = arith.constant 0 : i32
    return %arg0, %c0_i32 : i32, i32
  }
}

</mosaic_0001>

<llo_original>
// kernel: tpu_custom_call.1
$region0: #{tpu_custom_call.1}
  #allocation0 [shape = 'u32[]', space=smem, size = 0x4, offset = 0x4, fixed_abs, tag = 'smem constant byte address 0x4 - core index']
  #allocation1 [shape = 'u32[72,128]{1,0:T(1,128)}', space=vmem, size = 0x9000, scoped, tag = 'internal scratch']
  %s0 = inlined_call_operand.hbm [shape: f32[1,2048], index: 0, kind: input, shape index: {}]
  %s1 = inlined_call_operand.hbm [shape: f32[1,2048], index: 1, kind: output, shape index: {}]
  %s2 = sld [smem:[#allocation0]]
  $region18: #{tpu_custom_call.1} parent=0
    _
  %s4 = ssub.s32 1, %s2
  %s5 = scalar_select 0, %s4, %s2
  $region1: #{tpu_custom_call.1} parent=0
    #allocation2 [shape = 'u8[8192]{0}', space=vmem, size = 0x2000, scoped, tag = 'input window, operand 0, single buffered']
    #allocation3 [shape = 's32[1]{0}', space=sflag, size = 0x4, scoped, tag = 'scoped memory for tpu_custom_call.1']
    #allocation4 [shape = 's32[1]{0}', space=sflag, size = 0x4, scoped, tag = 'scoped memory for tpu_custom_call.1']
    #allocation5 [shape = 'u8[8192]{0}', space=vmem, size = 0x2000, scoped, tag = 'output window, operand 0, single buffered']
    %6 = vsyncpa [#allocation3], 0
    %7 = vsyncpa [#allocation4], 0
    // Predicated region
    $region2: #{tpu_custom_call.1} parent=1 // pred_check
      _
    $region3: #{tpu_custom_call.1} parent=1 // pred_check_branch
      %9 = sbr.rel (0) target = $region5
    $region4: #{tpu_custom_call.1} parent=1 // pred_region
      %11 = vsyncadd [#allocation3], 0
      %s13 = sshll.u32 %s0, 4
      %s14 = int_to_ptr.hbm [resolvable:$true] %s13
      %s15 = sshll.u32 [#allocation2], 4
      %s16 = int_to_ptr.vmem [resolvable:$true] %s15
      %18 = dma.hbm_to_vmem [thread:$0]  %s14, 256, %s16, [#allocation3]
    $region5: #{tpu_custom_call.1} parent=1 // pred_fallthru
      _
    // Predicated region
    $region6: #{tpu_custom_call.1} parent=1 // pred_check
      _
    $region7: #{tpu_custom_call.1} parent=1 // pred_check_branch
      %20 = sbr.rel (0) target = $region9
    $region8: #{tpu_custom_call.1} parent=1 // pred_region
      %22 = dma.done [#allocation3], 256
    $region9: #{tpu_custom_call.1} parent=1 // pred_fallthru
      _
    %v23 = vld [vmem:[#allocation2] sm:$0xff]
    %v24 = vld [vmem:[#allocation2 + $0x8] sm:$0xff]
    %25 = vst [vmem:[#allocation5] sm:$0xff] %v23
    %26 = vst [vmem:[#allocation5 + $0x8] sm:$0xff] %v24
    // Predicated region
    $region10: #{tpu_custom_call.1} parent=1 // pred_check
      _
    $region11: #{tpu_custom_call.1} parent=1 // pred_check_branch
      %28 = sbr.rel (0) target = $region13
    $region12: #{tpu_custom_call.1} parent=1 // pred_region
      %30 = vsyncadd [#allocation4], 0
      %s32 = sshll.u32 [#allocation5], 4
      %s33 = int_to_ptr.vmem [resolvable:$true] %s32
      %s34 = sshll.u32 %s1, 4
      %s35 = int_to_ptr.hbm [resolvable:$true] %s34
      %37 = dma.vmem_to_hbm [thread:$0]  %s33, 256, %s35, [#allocation4]
    $region13: #{tpu_custom_call.1} parent=1 // pred_fallthru
      _
    // Predicated region
    $region14: #{tpu_custom_call.1} parent=1 // pred_check
      _
    $region15: #{tpu_custom_call.1} parent=1 // pred_check_branch
      %39 = sbr.rel (0) target = $region17
    $region16: #{tpu_custom_call.1} parent=1 // pred_region
      %41 = dma.done [#allocation4], 256
    $region17: #{tpu_custom_call.1} parent=1 // pred_fallthru
      _
    %42 = vsyncpa [#allocation3], 1
    %43 = vsyncpa [#allocation4], 1

</llo_original>
